<compile_context>
chip_gen: v5e
topology: v5e:2x2
jax: 0.10.0
libtpu: 0.0.40
codegen_flags: <defaults>
</compile_context>

<pallas_src>
import functools
import math

import jax
import jax.numpy as jnp
from jax.experimental import pallas as pl
from jax.experimental.pallas import tpu as pltpu


def _layernorm_kernel(x_ref, params_ref, o_ref, *, eps):
    # x_ref: (block_rows, D)   params_ref: (2, D) float32  [scale; shift]
    params = params_ref[...]
    s32 = params[0:1, :]
    b32 = params[1:2, :]

    x = x_ref[...].astype(jnp.float32)
    d = x.shape[-1]

    mean = jnp.mean(x, axis=-1, keepdims=True)
    diff = x - mean
    # Unbiased variance (N - 1), matching torch.Tensor.var's default in the
    # reference module's forward().
    var = jnp.sum(diff * diff, axis=-1, keepdims=True) * jnp.float32(1.0 / (d - 1))
    inv_std = jax.lax.rsqrt(var + jnp.float32(eps))

    o_ref[...] = (diff * inv_std * s32 + b32).astype(o_ref.dtype)


def _vmem_limit_bytes():
    """Scoped-VMEM limit: <= 48 MiB, and <= 3/4 of reported capacity.

    48 MiB is safe even on v7x (64 MiB/TC) and far more than the modest
    double-buffered tiles chosen below actually need.
    """
    cap = 64 * 1024 * 1024  # conservative fallback (v7x per-TC)
    try:
        info = pltpu.get_tpu_info()
        cap = int(getattr(info, "vmem_capacity_bytes", cap))
    except Exception:
        pass
    return min((cap * 3) // 4, 48 * 1024 * 1024)


def _choose_block_rows(rows, d, itemsize, vmem_limit):
    """Pick a sublane-aligned row block.

    Constraints:
      * ~4 MiB of input bytes per block (already at 85-86% of HBM roofline;
        bigger tiles only add VMEM / spill risk).
      * double-buffered in+out slabs PLUS ~3 f32 working copies of the tile
        (x.astype(f32), diff, result) fit in half the scoped VMEM limit.
      * >= 8 grid steps when rows permit (>= 4 per TensorCore on v7x) so the
        DMA pipeline and both cores stay busy.
    """
    # Sublane packing: f32 -> 8, bf16/f16 -> 16, int8/fp8 -> 32.
    if itemsize >= 4:
        align = 8
    elif itemsize == 2:
        align = 16
    else:
        align = 32

    if rows <= align:
        return rows  # single tiny block; full-dim block shape is always legal

    # VMEM budget: 2 input buffers + 2 output buffers + ~3 f32 temporaries.
    per_row_vmem = d * (2 * itemsize + 2 * itemsize + 3 * 4)
    vmem_rows = max(align, (vmem_limit // 2) // max(per_row_vmem, 1))

    # Input-bytes target (~4 MiB/block).
    target_rows = max(align, (4 * 1024 * 1024) // max(d * itemsize, 1))

    block = min(vmem_rows, target_rows, 2048)

    # Keep >= 8 grid steps when rows permit (good balance on v7x dual-TC).
    min_steps = 8
    if rows >= min_steps * align:
        per_step = (rows // min_steps) // align * align
        block = min(block, max(align, per_step))

    # Never exceed the (alignment-rounded) row count.
    block = min(block, pl.cdiv(rows, align) * align)
    block = max(align, (block // align) * align)
    return block


def layer_norm_pallas(x, scale, shift, *, eps=1e-5, block_rows=None):
    """LayerNorm over the last axis of `x` with learnable scale/shift.

    x:     (..., D)
    scale: (D,)
    shift: (D,)
    """
    orig_shape = x.shape
    d = orig_shape[-1]
    rows = math.prod(orig_shape[:-1]) if len(orig_shape) > 1 else 1
    x2 = x.reshape(rows, d)

    itemsize = jnp.dtype(x.dtype).itemsize
    vmem_limit = _vmem_limit_bytes()
    if block_rows is None:
        block_rows = _choose_block_rows(rows, d, itemsize, vmem_limit)

    # No wrapper-side padding: Pallas handles the ragged tail block (reads are
    # short-copied, out-of-range writes are dropped). Rows are independent, so
    # garbage in the tail's padded region never affects valid outputs.
    grid = (pl.cdiv(rows, block_rows),)

    # Pack scale/shift into one (2, D) f32 slab: one DMA, no per-step astype.
    params = jnp.stack(
        [scale.astype(jnp.float32), shift.astype(jnp.float32)], axis=0
    )

    cost = pl.CostEstimate(
        flops=7 * rows * d,
        transcendentals=rows,  # one rsqrt per row
        bytes_accessed=rows * d * 2 * itemsize + 2 * d * 4,
    )

    out = pl.pallas_call(
        functools.partial(_layernorm_kernel, eps=eps),
        out_shape=jax.ShapeDtypeStruct((rows, d), x.dtype),
        grid_spec=pltpu.PrefetchScalarGridSpec(
            num_scalar_prefetch=0,
            grid=grid,
            in_specs=[
                pl.BlockSpec((block_rows, d), lambda i: (i, 0)),
                pl.BlockSpec((2, d), lambda i: (0, 0)),
            ],
            out_specs=pl.BlockSpec((block_rows, d), lambda i: (i, 0)),
        ),
        compiler_params=pltpu.CompilerParams(
            dimension_semantics=("parallel",),
            vmem_limit_bytes=int(vmem_limit),
        ),
        cost_estimate=cost,
    )(x2, params)

    return out.reshape(orig_shape)


def _reference_layer_norm(x, scale, shift, eps=1e-5):
    x32 = x.astype(jnp.float32)
    mean = jnp.mean(x32, axis=-1, keepdims=True)
    d = x32.shape[-1]
    var = jnp.sum((x32 - mean) ** 2, axis=-1, keepdims=True) / (d - 1)
    norm = (x32 - mean) / jnp.sqrt(var + eps)
    return (scale * norm + shift).astype(x.dtype)


if __name__ == "__main__":
    key = jax.random.PRNGKey(0)

    batch, seq, embedding_dim = 2, 8, 32

    x = jax.random.normal(key, (batch, seq, embedding_dim), dtype=jnp.float32)

    # Deterministic parameter init matching the module's __init__:
    # scale = ones(embedding_dim), shift = zeros(embedding_dim)
    scale = jnp.ones((embedding_dim,), dtype=jnp.float32)
    shift = jnp.zeros((embedding_dim,), dtype=jnp.float32)

    out = layer_norm_pallas(x, scale, shift)
    out = jax.block_until_ready(out)

    ref = _reference_layer_norm(x, scale, shift)
    assert out.shape == x.shape
    assert jnp.allclose(out, ref, atol=1e-5, rtol=1e-5), "mismatch vs reference"

    print("KERNEL_OK")
</pallas_src>

<mosaic_0001>
module attributes {stable_mosaic.version = 11 : i64} {
  func.func @_layernorm_kernel(%arg0: i32, %arg1: memref<16x32xf32, #tpu.memory_space<vmem>>, %arg2: memref<2x32xf32, #tpu.memory_space<vmem>>, %arg3: memref<16x32xf32, #tpu.memory_space<vmem>>) attributes {dimension_semantics = [#tpu.dimension_semantics<parallel>], iteration_bounds = array<i64: 1>, scalar_prefetch = 0 : i64, scratch_operands = 0 : i64, tpu.core_type = #tpu.core_type<tc>, window_params = [{transform_indices = @transform_0, window_bounds = array<i64: 16, 32>}, {pipeline_mode = #tpu.pipeline_mode<synchronous>, transform_indices = @transform_1, window_bounds = array<i64: 2, 32>}, {transform_indices = @transform_2, window_bounds = array<i64: 16, 32>}]} {
    %c0 = arith.constant 0 : index
    %c0_0 = arith.constant 0 : index
    %0 = vector.load %arg2[%c0, %c0_0] : memref<2x32xf32, #tpu.memory_space<vmem>>, vector<2x32xf32>
    %1 = vector.extract_strided_slice %0 {offsets = [0, 0], sizes = [1, 32], strides = [1, 1]} : vector<2x32xf32> to vector<1x32xf32>
    %2 = vector.extract_strided_slice %0 {offsets = [1, 0], sizes = [1, 32], strides = [1, 1]} : vector<2x32xf32> to vector<1x32xf32>
    %c0_1 = arith.constant 0 : index
    %c0_2 = arith.constant 0 : index
    %3 = vector.load %arg1[%c0_1, %c0_2] : memref<16x32xf32, #tpu.memory_space<vmem>>, vector<16x32xf32>
    %cst = arith.constant dense<0.000000e+00> : vector<16xf32>
    %4 = vector.multi_reduction <add>, %3, %cst [1] : vector<16x32xf32> to vector<16xf32>
    %5 = vector.shape_cast %4 : vector<16xf32> to vector<16x1xf32>
    %cst_3 = arith.constant 3.200000e+01 : f32
    %6 = vector.broadcast %cst_3 : f32 to vector<16x1xf32>
    %7 = arith.divf %5, %6 : vector<16x1xf32>
    %8 = vector.broadcast %7 : vector<16x1xf32> to vector<16x32xf32>
    %9 = arith.subf %3, %8 : vector<16x32xf32>
    %10 = arith.mulf %9, %9 : vector<16x32xf32>
    %cst_4 = arith.constant dense<0.000000e+00> : vector<16xf32>
    %11 = vector.multi_reduction <add>, %10, %cst_4 [1] : vector<16x32xf32> to vector<16xf32>
    %12 = vector.shape_cast %11 : vector<16xf32> to vector<16x1xf32>
    %cst_5 = arith.constant 0.0322580636 : f32
    %13 = vector.broadcast %cst_5 : f32 to vector<16x1xf32>
    %14 = arith.mulf %12, %13 : vector<16x1xf32>
    %cst_6 = arith.constant 9.99999974E-6 : f32
    %15 = vector.broadcast %cst_6 : f32 to vector<16x1xf32>
    %16 = arith.addf %14, %15 : vector<16x1xf32>
    %17 = math.rsqrt %16 : vector<16x1xf32>
    %18 = vector.broadcast %17 : vector<16x1xf32> to vector<16x32xf32>
    %19 = arith.mulf %9, %18 : vector<16x32xf32>
    %20 = vector.broadcast %1 : vector<1x32xf32> to vector<16x32xf32>
    %21 = arith.mulf %19, %20 : vector<16x32xf32>
    %22 = vector.broadcast %2 : vector<1x32xf32> to vector<16x32xf32>
    %23 = arith.addf %21, %22 : vector<16x32xf32>
    %c0_7 = arith.constant 0 : index
    %c0_8 = arith.constant 0 : index
    %24 = vector.load %arg3[%c0_7, %c0_8] : memref<16x32xf32, #tpu.memory_space<vmem>>, vector<16x32xf32>
    tpu.vector_store %arg3[%c0_7, %c0_8], %23 {strides = array<i32>} : memref<16x32xf32, #tpu.memory_space<vmem>>, vector<16x32xf32>,
    return
  }
  func.func @transform_0(%arg0: i32) -> (i32, i32) {
    %c0_i32 = arith.constant 0 : i32
    %c0_i32_0 = arith.constant 0 : i32
    return %arg0, %c0_i32 : i32, i32
  }
  func.func @transform_1(%arg0: i32) -> (i32, i32) {
    %c0_i32 = arith.constant 0 : i32
    %c0_i32_0 = arith.constant 0 : i32
    %c0_i32_1 = arith.constant 0 : i32
    return %c0_i32, %c0_i32_0 : i32, i32
  }
  func.func @transform_2(%arg0: i32) -> (i32, i32) {
    %c0_i32 = arith.constant 0 : i32
    %c0_i32_0 = arith.constant 0 : i32
    return %arg0, %c0_i32 : i32, i32
  }
}

</mosaic_0001>

<llo_original>
// kernel: tpu_custom_call.1
$region0: #{tpu_custom_call.1}
  #allocation0 [shape = 'u32[]', space=smem, size = 0x4, offset = 0x4, fixed_abs, tag = 'smem constant byte address 0x4 - core index']
  #allocation1 [shape = 'u32[72,128]{1,0:T(1,128)}', space=vmem, size = 0x9000, scoped, tag = 'internal scratch']
  %s0 = inlined_call_operand.hbm [shape: f32[16,32], index: 0, kind: input, shape index: {}]
  %s1 = inlined_call_operand.hbm [shape: f32[2,32], index: 1, kind: input, shape index: {}]
  %s2 = inlined_call_operand.hbm [shape: f32[16,32], index: 2, kind: output, shape index: {}]
  %s3 = sld [smem:[#allocation0]]
  $region26: #{tpu_custom_call.1} parent=0
    _
  %s5 = ssub.s32 1, %s3
  %s6 = scalar_select 0, %s5, %s3
  $region1: #{tpu_custom_call.1} parent=0
    #allocation2 [shape = 'u8[8192]{0}', space=vmem, size = 0x2000, scoped, tag = 'input window, operand 0, single buffered']
    #allocation3 [shape = 's32[1]{0}', space=sflag, size = 0x4, scoped, tag = 'scoped memory for tpu_custom_call.1']
    #allocation4 [shape = 's32[1]{0}', space=sflag, size = 0x4, scoped, tag = 'scoped memory for tpu_custom_call.1']
    #allocation5 [shape = 'u8[1024]{0}', space=vmem, size = 0x400, scoped, tag = 'input window, operand 1, single buffered']
    #allocation6 [shape = 's32[1]{0}', space=sflag, size = 0x4, scoped, tag = 'scoped memory for tpu_custom_call.1']
    #allocation7 [shape = 'u8[8192]{0}', space=vmem, size = 0x2000, scoped, tag = 'output window, operand 0, single buffered']
    %7 = vsyncpa [#allocation3], 0
    %8 = vsyncpa [#allocation6], 0
    %9 = vsyncpa [#allocation4], 0
    // Predicated region
    $region2: #{tpu_custom_call.1} parent=1 // pred_check
      _
    $region3: #{tpu_custom_call.1} parent=1 // pred_check_branch
      %11 = sbr.rel (0) target = $region5
    $region4: #{tpu_custom_call.1} parent=1 // pred_region
      %13 = vsyncadd [#allocation3], 0
      %s14 = sshll.u32 %s0, 4
      %s15 = int_to_ptr.hbm [resolvable:$true] %s14
      %s16 = sshll.u32 [#allocation2], 4
      %s17 = int_to_ptr.vmem [resolvable:$true] %s16
      %22 = dma.hbm_to_vmem [thread:$0]  %s15, 256, %s17, [#allocation3], 128, 128, 8
    $region5: #{tpu_custom_call.1} parent=1 // pred_fallthru
      _
    // Predicated region
    $region6: #{tpu_custom_call.1} parent=1 // pred_check
      _
    $region7: #{tpu_custom_call.1} parent=1 // pred_check_branch
      %24 = sbr.rel (0) target = $region9
    $region8: #{tpu_custom_call.1} parent=1 // pred_region
      %26 = vsyncadd [#allocation6], 0
      %s28 = sshll.u32 %s1, 4
      %s29 = int_to_ptr.hbm [resolvable:$true] %s28
      %s30 = sshll.u32 [#allocation5], 4
      %s31 = int_to_ptr.vmem [resolvable:$true] %s30
      %33 = dma.hbm_to_vmem [thread:$0]  %s29, 32, %s31, [#allocation6]
    $region9: #{tpu_custom_call.1} parent=1 // pred_fallthru
      _
    // Predicated region
    $region10: #{tpu_custom_call.1} parent=1 // pred_check
      _
    $region11: #{tpu_custom_call.1} parent=1 // pred_check_branch
      %35 = sbr.rel (0) target = $region13
    $region12: #{tpu_custom_call.1} parent=1 // pred_region
      %37 = dma.done [#allocation3], 256
    $region13: #{tpu_custom_call.1} parent=1 // pred_fallthru
      _
    // Predicated region
    $region14: #{tpu_custom_call.1} parent=1 // pred_check
      _
    $region15: #{tpu_custom_call.1} parent=1 // pred_check_branch
      %39 = sbr.rel (0) target = $region17
    $region16: #{tpu_custom_call.1} parent=1 // pred_region
      %41 = dma.done [#allocation6], 32
    $region17: #{tpu_custom_call.1} parent=1 // pred_fallthru
      _
    %v42 = vld [vmem:[#allocation5] sm:$0x3]
    %v43 = vld [vmem:[#allocation2] sm:$0xff]
    %v44 = vld [vmem:[#allocation2 + $0x8] sm:$0xff]
    %vm45 = vcmask 261120
    %v46 = vsel %vm45, %v43, 0.0
    %47 = vadd.xlane.f32.xlu0 %v46
    %v48 = vpop.xlane.xlu0 %47
    %v49 = vsel %vm45, %v44, 0.0
    %50 = vadd.xlane.f32.xlu0 %v49
    %v51 = vpop.xlane.xlu0 %50
    %v52 = vrcp.pop 32.0
    %v53 = vmul.f32 32.0, %v52
    %v54 = vsub.f32 1.0, %v53
    %v55 = vmul.f32 %v52, %v54
    %v56 = vadd.f32 %v52, %v55
    %vm57 = vweird.f32 %v52
    %v58 = vsel %vm57, %v52, %v56
    %v59 = vmul.f32 %v48, %v58
    %v60 = vmul.f32 %v51, %v58
    %v61 = vsub.f32 %v43, %v59
    %v62 = vsub.f32 %v44, %v60
    %v63 = vmul.f32 %v61, %v61
    %v64 = vmul.f32 %v62, %v62
    %v65 = vsel %vm45, %v63, 0.0
    %66 = vadd.xlane.f32.xlu0 %v65
    %v67 = vpop.xlane.xlu0 %66
    %v68 = vsel %vm45, %v64, 0.0
    %69 = vadd.xlane.f32.xlu0 %v68
    %v70 = vpop.xlane.xlu0 %69
    %v71 = vmul.f32 %v67, 0.032258064
    %v72 = vmul.f32 %v70, 0.032258064
    %v73 = vadd.f32 %v71, 1e-05
    %v74 = vadd.f32 %v72, 1e-05
    %v75 = vrsqrt.pop %v73
    %v76 = vmul.f32 %v75, %v73
    %v77 = vmul.f32 %v76, %v75
    %v78 = vmul.f32 0.5, %v77
    %v79 = vsub.f32 1.5, %v78
    %v80 = vmul.f32 %v75, %v79
    %vm81 = vweird.f32 %v73
    %vm82 = vweird.f32 %v75
    %vm83 = vmor %vm81, %vm82
    %v84 = vsel %vm83, %v75, %v80
    %v85 = vrsqrt.pop %v74
    %v86 = vmul.f32 %v85, %v74
    %v87 = vmul.f32 %v86, %v85
    %v88 = vmul.f32 0.5, %v87
    %v89 = vsub.f32 1.5, %v88
    %v90 = vmul.f32 %v85, %v89
    %vm91 = vweird.f32 %v74
    %vm92 = vweird.f32 %v85
    %vm93 = vmor %vm91, %vm92
    %v94 = vsel %vm93, %v85, %v90
    %v95 = vmul.f32 %v61, %v84
    %v96 = vmul.f32 %v62, %v94
    %v97 = vperm.slane %v42, 0
    %v98 = vmul.f32 %v95, %v97
    %v99 = vmul.f32 %v96, %v97
    %v100 = vperm.slane %v42, 1
    %v101 = vadd.f32 %v98, %v100
    %v102 = vadd.f32 %v99, %v100
    %103 = vst.msk [vmem:[#allocation7] sm:$0xff] %vm45, %v101
    %104 = vst.msk [vmem:[#allocation7 + $0x8] sm:$0xff] %vm45, %v102
    // Predicated region
    $region18: #{tpu_custom_call.1} parent=1 // pred_check
      _
    $region19: #{tpu_custom_call.1} parent=1 // pred_check_branch
      %106 = sbr.rel (0) target = $region21
    $region20: #{tpu_custom_call.1} parent=1 // pred_region
      %108 = vsyncadd [#allocation4], 0
      %s109 = sshll.u32 [#allocation7], 4
      %s110 = int_to_ptr.vmem [resolvable:$true] %s109
      %s111 = sshll.u32 %s2, 4
      %s112 = int_to_ptr.hbm [resolvable:$true] %s111
      %117 = dma.vmem_to_hbm [thread:$0]  %s110, 256, %s112, [#allocation4], 128, 128, 8
    $region21: #{tpu_custom_call.1} parent=1 // pred_fallthru
      _
    // Predicated region
    $region22: #{tpu_custom_call.1} parent=1 // pred_check
      _
    $region23: #{tpu_custom_call.1} parent=1 // pred_check_branch
      %119 = sbr.rel (0) target = $region25
    $region24: #{tpu_custom_call.1} parent=1 // pred_region
      %121 = dma.done [#allocation4], 256
    $region25: #{tpu_custom_call.1} parent=1 // pred_fallthru
      _
    %122 = vsyncpa [#allocation3], 1
    %123 = vsyncpa [#allocation6], 1
    %124 = vsyncpa [#allocation4], 1

</llo_original>
